<compile_context>
chip_gen: v5e
topology: v5e:2x2
jax: 0.10.0
libtpu: 0.0.40
codegen_flags: <defaults>
</compile_context>

<pallas_src>
import jax
import jax.numpy as jnp
from jax.experimental import pallas as pl
from jax.experimental.pallas import tpu as pltpu

_LANES = 512        # lane-dense last dim (multiple of 128 -> unmasked vst)
_TILE_ROWS = 512    # 512 x 512 f32 = 1 MiB per tile side


def _copy_kernel(x_ref, o_ref):
    """Identity: the module returns x1 unchanged."""
    o_ref[...] = x_ref[...]


def _lane_dense_copy(x2d):
    """Tiled lane-dense copy for large inputs (rows, 512)."""
    rows, lanes = x2d.shape
    tm = min(rows, _TILE_ROWS)
    grid = (pl.cdiv(rows, tm),)
    spec = pl.BlockSpec((tm, lanes), lambda i: (i, 0))
    return pl.pallas_call(
        _copy_kernel,
        out_shape=jax.ShapeDtypeStruct((rows, lanes), x2d.dtype),
        grid=grid,
        in_specs=[spec],
        out_specs=spec,
        # Output aliases the jit-owned reshape intermediate -> no new HBM buffer.
        input_output_aliases={0: 0},
        compiler_params=pltpu.CompilerParams(
            dimension_semantics=("parallel",)),
    )(x2d)


def _whole_array_copy(x):
    """Single-block copy for small inputs (block == full array dims)."""
    return pl.pallas_call(
        _copy_kernel,
        out_shape=jax.ShapeDtypeStruct(x.shape, x.dtype),
    )(x)


def _model_forward(x1):
    """Matches Model.forward: returns x1 (identity)."""
    n = x1.size  # static at trace time
    if n % _LANES == 0 and n >= 8 * _LANES:
        y = _lane_dense_copy(x1.reshape(n // _LANES, _LANES))
        return y.reshape(x1.shape)
    return _whole_array_copy(x1)


model_forward = jax.jit(_model_forward)


if __name__ == "__main__":
    key = jax.random.PRNGKey(0)

    # Matches the reference script: x1 = torch.randn(2, 2, 2)
    x1 = jax.random.normal(key, (2, 2, 2), dtype=jnp.float32)

    out = jax.block_until_ready(model_forward(x1))

    # Module semantics: output is exactly the input.
    assert out.shape == x1.shape
    assert jnp.allclose(out, x1)

    # Exercise the lane-dense tiled path too (still identity semantics).
    xbig = jax.random.normal(key, (8, 1024, 512), dtype=jnp.float32)
    outbig = jax.block_until_ready(model_forward(xbig))
    assert outbig.shape == xbig.shape
    assert jnp.allclose(outbig, xbig)

    print("KERNEL_OK")
</pallas_src>

<mosaic_0001>
module attributes {stable_mosaic.version = 11 : i64} {
  func.func @_copy_kernel(%arg0: memref<2x2x2xf32, #tpu.memory_space<vmem>>, %arg1: memref<2x2x2xf32, #tpu.memory_space<vmem>>) attributes {dimension_semantics = [], scalar_prefetch = 0 : i64, scratch_operands = 0 : i64, tpu.core_type = #tpu.core_type<tc>} {
    %c0 = arith.constant 0 : index
    %c0_0 = arith.constant 0 : index
    %c0_1 = arith.constant 0 : index
    %0 = vector.load %arg0[%c0, %c0_0, %c0_1] : memref<2x2x2xf32, #tpu.memory_space<vmem>>, vector<2x2x2xf32>
    %c0_2 = arith.constant 0 : index
    %c0_3 = arith.constant 0 : index
    %c0_4 = arith.constant 0 : index
    %1 = vector.load %arg1[%c0_2, %c0_3, %c0_4] : memref<2x2x2xf32, #tpu.memory_space<vmem>>, vector<2x2x2xf32>
    tpu.vector_store %arg1[%c0_2, %c0_3, %c0_4], %0 {strides = array<i32>} : memref<2x2x2xf32, #tpu.memory_space<vmem>>, vector<2x2x2xf32>,
    return
  }
}

</mosaic_0001>

<llo_original>
// kernel: _model_forward.1
$region0: #{_model_forward.1}
  #allocation0 [shape = 'u32[]', space=smem, size = 0x4, offset = 0x4, fixed_abs, tag = 'smem constant byte address 0x4 - core index']
  #allocation1 [shape = 'u32[72,128]{1,0:T(1,128)}', space=vmem, size = 0x9000, scoped, tag = 'internal scratch']
  %s0 = inlined_call_operand.hbm [shape: f32[2,2,2], index: 0, kind: input, shape index: {}]
  %s1 = inlined_call_operand.hbm [shape: f32[2,2,2], index: 1, kind: output, shape index: {}]
  %s2 = sld [smem:[#allocation0]]
  $region18: #{_model_forward.1} parent=0
    _
  %s4 = ssub.s32 1, %s2
  %s5 = scalar_select 0, %s4, %s2
  $region1: #{_model_forward.1} parent=0
    #allocation2 [shape = 'u8[2048]{0}', space=vmem, size = 0x800, scoped, tag = 'input window, operand 0, single buffered']
    #allocation3 [shape = 's32[1]{0}', space=sflag, size = 0x4, scoped, tag = 'scoped memory for _model_forward.1']
    #allocation4 [shape = 's32[1]{0}', space=sflag, size = 0x4, scoped, tag = 'scoped memory for _model_forward.1']
    #allocation5 [shape = 'u8[2048]{0}', space=vmem, size = 0x800, scoped, tag = 'output window, operand 0, single buffered']
    %6 = vsyncpa [#allocation3], 0
    %7 = vsyncpa [#allocation4], 0
    // Predicated region
    $region2: #{_model_forward.1} parent=1 // pred_check
      _
    $region3: #{_model_forward.1} parent=1 // pred_check_branch
      %9 = sbr.rel (0) target = $region5
    $region4: #{_model_forward.1} parent=1 // pred_region
      %11 = vsyncadd [#allocation3], 0
      %s12 = sshll.u32 %s0, 4
      %s13 = int_to_ptr.hbm [resolvable:$true] %s12
      %s14 = sshll.u32 [#allocation2], 4
      %s15 = int_to_ptr.vmem [resolvable:$true] %s14
      %20 = dma.hbm_to_vmem [thread:$0]  %s13, 64, %s15, [#allocation3], 32, 32, 2
    $region5: #{_model_forward.1} parent=1 // pred_fallthru
      _
    // Predicated region
    $region6: #{_model_forward.1} parent=1 // pred_check
      _
    $region7: #{_model_forward.1} parent=1 // pred_check_branch
      %22 = sbr.rel (0) target = $region9
    $region8: #{_model_forward.1} parent=1 // pred_region
      %24 = dma.done [#allocation3], 64
    $region9: #{_model_forward.1} parent=1 // pred_fallthru
      _
    %v25 = vld [vmem:[#allocation2] sm:$0x3]
    %v26 = vld [vmem:[#allocation2 + $0x2] sm:$0x3]
    %vm27 = vcmask 9216
    %28 = vst.msk [vmem:[#allocation5] sm:$0x3] %vm27, %v25
    %29 = vst.msk [vmem:[#allocation5 + $0x2] sm:$0x3] %vm27, %v26
    // Predicated region
    $region10: #{_model_forward.1} parent=1 // pred_check
      _
    $region11: #{_model_forward.1} parent=1 // pred_check_branch
      %31 = sbr.rel (0) target = $region13
    $region12: #{_model_forward.1} parent=1 // pred_region
      %33 = vsyncadd [#allocation4], 0
      %s34 = sshll.u32 [#allocation5], 4
      %s35 = int_to_ptr.vmem [resolvable:$true] %s34
      %s36 = sshll.u32 %s1, 4
      %s37 = int_to_ptr.hbm [resolvable:$true] %s36
      %42 = dma.vmem_to_hbm [thread:$0]  %s35, 64, %s37, [#allocation4], 32, 32, 2
    $region13: #{_model_forward.1} parent=1 // pred_fallthru
      _
    // Predicated region
    $region14: #{_model_forward.1} parent=1 // pred_check
      _
    $region15: #{_model_forward.1} parent=1 // pred_check_branch
      %44 = sbr.rel (0) target = $region17
    $region16: #{_model_forward.1} parent=1 // pred_region
      %46 = dma.done [#allocation4], 64
    $region17: #{_model_forward.1} parent=1 // pred_fallthru
      _
    %47 = vsyncpa [#allocation3], 1
    %48 = vsyncpa [#allocation4], 1

</llo_original>
